<compile_context>
chip_gen: v5e
topology: v5e:2x2
jax: 0.10.0
libtpu: 0.0.40
codegen_flags: <defaults>
</compile_context>

<pallas_src>
import functools
import math

import jax
import jax.numpy as jnp
from jax.experimental import pallas as pl
from jax.experimental.pallas import tpu as pltpu

_LANES = 128   # padded hidden width / lane tile
_H1 = 32       # per-head layer-1 width (fixed by the module config)
_H2 = 8        # per-head layer-2 width


def _round_up(n, m):
    return (n + m - 1) // m * m


def _policy_kernel(min_sigma, max_sigma, action_dim,
                   x_ref, noise_ref, w1_ref, w23_ref, b_ref, out_ref):
    A = action_dim
    H = _LANES
    tb = x_ref.shape[0]

    # ---- fused (mu ++ sigma) 3-matmul chain: bf16 on MXU, f32 accumulation ----
    x_bf = x_ref[...].astype(jnp.bfloat16)                 # (tb, F_pad)
    w1 = w1_ref[...]                                       # (F_pad, 128) bf16
    w2 = w23_ref[0:H, :]                                   # (128, 128)   bf16
    w3 = w23_ref[H:2 * H, :]                               # (128, 128)   bf16
    b1 = b_ref[0:1, :]                                     # (1, 128) f32
    b2 = b_ref[1:2, :]
    b3 = b_ref[2:3, :]

    h = jnp.dot(x_bf, w1, preferred_element_type=jnp.float32) + b1
    h = jnp.maximum(h, 0.0)                                # ReLU
    h = jnp.dot(h.astype(jnp.bfloat16), w2, preferred_element_type=jnp.float32) + b2
    h = jnp.maximum(h, 0.0)                                # ReLU
    raw = jnp.dot(h.astype(jnp.bfloat16), w3, preferred_element_type=jnp.float32) + b3

    # One tanh over the full 128-lane slab.  Lane layout of `raw` (see packing):
    #   mu    at lane groups {0,1,2}*A
    #   sigma at lanes 64 + {0,1,3,4}*A   (roll by 64 overlays it onto mu's lanes)
    y = (jnp.tanh(raw) + 1.0) * 0.5
    sig = jnp.clip(pltpu.roll(y, shift=H // 2, axis=1), min_sigma, max_sigma)

    # Widen noise (tb,A) -> (tb,128) at lane groups 0 and 1 with lane broadcasts +
    # selects (no unaligned concat, no masked stores).
    lane = jax.lax.broadcasted_iota(jnp.int32, (tb, H), 1)
    n = noise_ref[...]                                     # (tb, A) f32
    noise_sl = jnp.zeros((tb, H), jnp.float32)
    for k in range(A):
        mk = jnp.logical_or(lane == k, lane == A + k)
        noise_sl = jnp.where(mk, n[:, k:k + 1], noise_sl)

    # policy.sample() (reparameterized with supplied noise), remap, log_prob, entropy.
    # Valid wherever mu, sigma, noise are co-located: lane groups 0 and 1.
    action = y + sig * noise_sl
    filt = jnp.abs(action - 0.5) >= 0.5
    # Matches the torch source verbatim: (action + 3*sigma - mu) * (1/6 * sigma)
    remapped = (action + 3.0 * sig - y) * ((1.0 / 6.0) * sig)
    action = jnp.where(filt, remapped, action)

    log_sig = jnp.log(sig)
    z = (action - y) / sig                                 # exact divide (log_prob precision)
    log_prob = -0.5 * (z * z) - log_sig - 0.5 * math.log(2.0 * math.pi)
    entropy = 0.5 + 0.5 * math.log(2.0 * math.pi) + log_sig

    # ---- assemble output slab in-register; ONE unmasked lane-dense store ----
    #   lanes [0:A)=action [A:2A)=log_prob [2A:3A)=mu [3A:4A)=sigma [4A:5A)=entropy
    out = jnp.where(lane < A, action,
          jnp.where(lane < 2 * A, log_prob,
          jnp.where(lane < 3 * A, y,
          jnp.where(lane < 4 * A, sig,
          jnp.where(lane < 5 * A, entropy, 0.0)))))
    out_ref[...] = out.astype(out_ref.dtype)


def pack_policy_params(params, feature_dim, action_dim):
    """Fuse the mu/sigma heads into one 128-lane-wide 3-layer chain.

    Returns (w1 bf16 (F_pad,128), w23 bf16 (256,128), bias f32 (8,128)).
    Layer-3 columns are replicated so the kernel needs no scatter rolls:
      mu    -> lane groups {0,1,2}        (sample math, log_prob math, mu output)
      sigma -> lanes 64 + groups {0,1,3,4} (aligned to mu after a roll by 64)
    In production this packing is done once per parameter update and cached.
    """
    A = action_dim
    H = _LANES
    half = H // 2
    assert 5 * A <= half, "action_dim too large for 128-lane output packing"
    F_pad = _round_up(max(feature_dim, 8), 8)

    w1 = jnp.zeros((F_pad, H), jnp.float32)
    w1 = w1.at[:feature_dim, 0:_H1].set(params["mu_w1"])
    w1 = w1.at[:feature_dim, _H1:2 * _H1].set(params["sigma_w1"])

    w2 = jnp.zeros((H, H), jnp.float32)
    w2 = w2.at[0:_H1, 0:_H2].set(params["mu_w2"])
    w2 = w2.at[_H1:2 * _H1, _H2:2 * _H2].set(params["sigma_w2"])

    w3 = jnp.zeros((H, H), jnp.float32)
    for g in (0, 1, 2):
        w3 = w3.at[0:_H2, g * A:(g + 1) * A].set(params["mu_w3"])
    for g in (0, 1, 3, 4):
        w3 = w3.at[_H2:2 * _H2, half + g * A: half + (g + 1) * A].set(params["sigma_w3"])

    b = jnp.zeros((8, H), jnp.float32)
    b = b.at[0, 0:_H1].set(params["mu_b1"].reshape(-1))
    b = b.at[0, _H1:2 * _H1].set(params["sigma_b1"].reshape(-1))
    b = b.at[1, 0:_H2].set(params["mu_b2"].reshape(-1))
    b = b.at[1, _H2:2 * _H2].set(params["sigma_b2"].reshape(-1))
    for g in (0, 1, 2):
        b = b.at[2, g * A:(g + 1) * A].set(params["mu_b3"].reshape(-1))
    for g in (0, 1, 3, 4):
        b = b.at[2, half + g * A: half + (g + 1) * A].set(params["sigma_b3"].reshape(-1))

    return w1.astype(jnp.bfloat16), jnp.concatenate([w2, w3], 0).astype(jnp.bfloat16), b


def policy_network_forward(x, noise, params, *, min_sigma, max_sigma,
                           require_entropy=False, require_musigma=False):
    """params: dict with mu_{w1,b1,w2,b2,w3,b3} / sigma_{...}; biases shaped (1, out)."""
    batch, feature_dim = x.shape
    action_dim = params["mu_w3"].shape[1]
    A = action_dim

    w1, w23, b = pack_policy_params(params, feature_dim, action_dim)
    f_pad = w1.shape[0]

    # Large batch tiles (<=512 rows, floor 8) amortize the ~0.35us/step pipeline
    # overhead; for moderate batches force >=2 grid steps so ("parallel",) can
    # span both v7x TensorCores (harmless on single-TC v5e/v6e).
    tb = min(512, _round_up(batch, 8))
    if batch >= 16 and _round_up(batch, tb) // tb < 2:
        tb = _round_up((batch + 1) // 2, 8)
    padded = _round_up(batch, tb)
    grid = (padded // tb,)

    x_p = jnp.pad(x.astype(jnp.float32),
                  ((0, padded - batch), (0, f_pad - feature_dim)))
    n_p = jnp.pad(noise.astype(jnp.float32), ((0, padded - batch), (0, 0)))

    kernel = functools.partial(_policy_kernel, float(min_sigma), float(max_sigma), A)

    out = pl.pallas_call(
        kernel,
        out_shape=jax.ShapeDtypeStruct((padded, _LANES), jnp.float32),
        grid_spec=pltpu.PrefetchScalarGridSpec(
            num_scalar_prefetch=0,
            grid=grid,
            in_specs=[
                pl.BlockSpec((tb, f_pad), lambda i: (i, 0)),           # x (narrow)
                pl.BlockSpec((tb, A), lambda i: (i, 0)),               # noise (narrow)
                pl.BlockSpec((f_pad, _LANES), lambda i: (0, 0)),       # w1
                pl.BlockSpec((2 * _LANES, _LANES), lambda i: (0, 0)),  # w2|w3 packed
                pl.BlockSpec((8, _LANES), lambda i: (0, 0)),           # biases packed
            ],
            out_specs=pl.BlockSpec((tb, _LANES), lambda i: (i, 0)),
        ),
        compiler_params=pltpu.CompilerParams(
            dimension_semantics=("parallel",)),
    )(x_p, n_p, w1, w23, b)

    out = out[:batch]
    action = out[:, 0 * A:1 * A]
    log_prob = out[:, 1 * A:2 * A]
    if require_entropy:
        return action, log_prob, out[:, 4 * A:5 * A]
    if require_musigma:
        return action, log_prob, out[:, 2 * A:3 * A], out[:, 3 * A:4 * A]
    return action, log_prob


def init_params(key, feature_dim, action_dim):
    """Deterministic synthetic init matching PolicyNetwork.__init__ MLP shapes."""
    dims = [(feature_dim, _H1), (_H1, _H2), (_H2, action_dim)]
    params = {}
    for head in ("mu", "sigma"):
        for li, (din, dout) in enumerate(dims, start=1):
            key, kw, kb = jax.random.split(key, 3)
            scale = 1.0 / math.sqrt(din)
            params[f"{head}_w{li}"] = jax.random.uniform(
                kw, (din, dout), jnp.float32, -scale, scale)
            params[f"{head}_b{li}"] = jax.random.uniform(
                kb, (1, dout), jnp.float32, -scale, scale)
    return params


if __name__ == "__main__":
    key = jax.random.PRNGKey(0)
    batch, feature_dim, action_dim = 8, 12, 4
    min_sigma, max_sigma = 0.01, 0.7

    k_params, k_x, k_noise = jax.random.split(key, 3)
    params = init_params(k_params, feature_dim, action_dim)
    x = jax.random.normal(k_x, (batch, feature_dim), jnp.float32)
    noise = jax.random.normal(k_noise, (batch, action_dim), jnp.float32)

    action, log_prob = policy_network_forward(
        x, noise, params, min_sigma=min_sigma, max_sigma=max_sigma)
    jax.block_until_ready((action, log_prob))
    assert action.shape == (batch, action_dim)
    assert log_prob.shape == (batch, action_dim)
    assert bool(jnp.all(jnp.isfinite(action)))
    assert bool(jnp.all(jnp.isfinite(log_prob)))

    # other return paths (same compiled kernel, different wrapper slices)
    a2, lp2, mu, sigma = policy_network_forward(
        x, noise, params, min_sigma=min_sigma, max_sigma=max_sigma,
        require_musigma=True)
    a3, lp3, entropy = policy_network_forward(
        x, noise, params, min_sigma=min_sigma, max_sigma=max_sigma,
        require_entropy=True)
    jax.block_until_ready((mu, sigma, entropy))

    # ---- correctness checks -------------------------------------------------
    # (1) mu/sigma vs a plain-JAX f32 reference (bf16-matmul tolerance).
    def mlp(xx, w1_, b1_, w2_, b2_, w3_, b3_):
        h = jnp.maximum(xx @ w1_ + b1_, 0.0)
        h = jnp.maximum(h @ w2_ + b2_, 0.0)
        return h @ w3_ + b3_
    mu_ref = (jnp.tanh(mlp(x, params["mu_w1"], params["mu_b1"], params["mu_w2"],
                           params["mu_b2"], params["mu_w3"], params["mu_b3"])) + 1.0) * 0.5
    sg_ref = jnp.clip((jnp.tanh(mlp(x, params["sigma_w1"], params["sigma_b1"],
                                    params["sigma_w2"], params["sigma_b2"],
                                    params["sigma_w3"], params["sigma_b3"])) + 1.0) * 0.5,
                      min_sigma, max_sigma)
    assert float(jnp.max(jnp.abs(mu - mu_ref))) < 5e-2
    assert float(jnp.max(jnp.abs(sigma - sg_ref))) < 5e-2
    assert bool(jnp.all(sigma >= min_sigma - 1e-6)) and bool(jnp.all(sigma <= max_sigma + 1e-6))

    # (2) action / log_prob / entropy self-consistency with the returned mu/sigma.
    a_chk = mu + sigma * noise
    f_chk = jnp.abs(a_chk - 0.5) >= 0.5
    a_chk = jnp.where(f_chk, (a_chk + 3.0 * sigma - mu) * ((1.0 / 6.0) * sigma), a_chk)
    lp_chk = (-0.5 * ((action - mu) / sigma) ** 2 - jnp.log(sigma)
              - 0.5 * math.log(2.0 * math.pi))
    en_chk = 0.5 + 0.5 * math.log(2.0 * math.pi) + jnp.log(sigma)
    assert float(jnp.max(jnp.abs(action - a_chk))) < 1e-4
    assert float(jnp.max(jnp.abs(log_prob - lp_chk))) < 1e-3
    assert float(jnp.max(jnp.abs(entropy - en_chk))) < 1e-4

    print("KERNEL_OK")
</pallas_src>

<mosaic_0001>
module attributes {stable_mosaic.version = 11 : i64} {
  func.func @_policy_kernel(%arg0: i32, %arg1: memref<8x16xf32, #tpu.memory_space<vmem>>, %arg2: memref<8x4xf32, #tpu.memory_space<vmem>>, %arg3: memref<16x128xbf16, #tpu.memory_space<vmem>>, %arg4: memref<256x128xbf16, #tpu.memory_space<vmem>>, %arg5: memref<8x128xf32, #tpu.memory_space<vmem>>, %arg6: memref<8x128xf32, #tpu.memory_space<vmem>>) attributes {dimension_semantics = [#tpu.dimension_semantics<parallel>], iteration_bounds = array<i64: 1>, scalar_prefetch = 0 : i64, scratch_operands = 0 : i64, tpu.core_type = #tpu.core_type<tc>, window_params = [{transform_indices = @transform_0, window_bounds = array<i64: 8, 16>}, {transform_indices = @transform_1, window_bounds = array<i64: 8, 4>}, {pipeline_mode = #tpu.pipeline_mode<synchronous>, transform_indices = @transform_2, window_bounds = array<i64: 16, 128>}, {pipeline_mode = #tpu.pipeline_mode<synchronous>, transform_indices = @transform_3, window_bounds = array<i64: 256, 128>}, {pipeline_mode = #tpu.pipeline_mode<synchronous>, transform_indices = @transform_4, window_bounds = array<i64: 8, 128>}, {transform_indices = @transform_5, window_bounds = array<i64: 8, 128>}]} {
    %c0 = arith.constant 0 : index
    %c0_0 = arith.constant 0 : index
    %0 = vector.load %arg1[%c0, %c0_0] : memref<8x16xf32, #tpu.memory_space<vmem>>, vector<8x16xf32>
    %1 = arith.truncf %0 : vector<8x16xf32> to vector<8x16xbf16>
    %c0_1 = arith.constant 0 : index
    %c0_2 = arith.constant 0 : index
    %2 = vector.load %arg3[%c0_1, %c0_2] : memref<16x128xbf16, #tpu.memory_space<vmem>>, vector<16x128xbf16>
    %c0_3 = arith.constant 0 : index
    %c0_4 = arith.constant 0 : index
    %3 = vector.load %arg4[%c0_3, %c0_4] : memref<256x128xbf16, #tpu.memory_space<vmem>>, vector<128x128xbf16>
    %c128 = arith.constant 128 : index
    %c0_5 = arith.constant 0 : index
    %4 = vector.load %arg4[%c128, %c0_5] : memref<256x128xbf16, #tpu.memory_space<vmem>>, vector<128x128xbf16>
    %c0_6 = arith.constant 0 : index
    %c0_7 = arith.constant 0 : index
    %5 = vector.load %arg5[%c0_6, %c0_7] : memref<8x128xf32, #tpu.memory_space<vmem>>, vector<1x128xf32>
    %c1 = arith.constant 1 : index
    %c0_8 = arith.constant 0 : index
    %6 = vector.load %arg5[%c1, %c0_8] : memref<8x128xf32, #tpu.memory_space<vmem>>, vector<1x128xf32>
    %c2 = arith.constant 2 : index
    %c0_9 = arith.constant 0 : index
    %7 = vector.load %arg5[%c2, %c0_9] : memref<8x128xf32, #tpu.memory_space<vmem>>, vector<1x128xf32>
    %cst = arith.constant dense<0.000000e+00> : vector<8x128xf32>
    %8 = tpu.matmul %1, %2, %cst {dimension_numbers = #tpu.dot_dimension_numbers<[1], [0], [0], [1], [0, 0, 1, 1], [], []>} : vector<8x16xbf16>, vector<16x128xbf16>, vector<8x128xf32> -> vector<8x128xf32>
    %9 = vector.broadcast %5 : vector<1x128xf32> to vector<8x128xf32>
    %10 = arith.addf %8, %9 : vector<8x128xf32>
    %cst_10 = arith.constant 0.000000e+00 : f32
    %11 = vector.broadcast %cst_10 : f32 to vector<8x128xf32>
    %12 = arith.maximumf %10, %11 : vector<8x128xf32>
    %13 = arith.truncf %12 : vector<8x128xf32> to vector<8x128xbf16>
    %cst_11 = arith.constant dense<0.000000e+00> : vector<8x128xf32>
    %14 = tpu.matmul %13, %3, %cst_11 {dimension_numbers = #tpu.dot_dimension_numbers<[1], [0], [0], [1], [0, 0, 1, 1], [], []>} : vector<8x128xbf16>, vector<128x128xbf16>, vector<8x128xf32> -> vector<8x128xf32>
    %15 = vector.broadcast %6 : vector<1x128xf32> to vector<8x128xf32>
    %16 = arith.addf %14, %15 : vector<8x128xf32>
    %cst_12 = arith.constant 0.000000e+00 : f32
    %17 = vector.broadcast %cst_12 : f32 to vector<8x128xf32>
    %18 = arith.maximumf %16, %17 : vector<8x128xf32>
    %19 = arith.truncf %18 : vector<8x128xf32> to vector<8x128xbf16>
    %cst_13 = arith.constant dense<0.000000e+00> : vector<8x128xf32>
    %20 = tpu.matmul %19, %4, %cst_13 {dimension_numbers = #tpu.dot_dimension_numbers<[1], [0], [0], [1], [0, 0, 1, 1], [], []>} : vector<8x128xbf16>, vector<128x128xbf16>, vector<8x128xf32> -> vector<8x128xf32>
    %21 = vector.broadcast %7 : vector<1x128xf32> to vector<8x128xf32>
    %22 = arith.addf %20, %21 : vector<8x128xf32>
    %23 = math.tanh %22 : vector<8x128xf32>
    %cst_14 = arith.constant 1.000000e+00 : f32
    %24 = vector.broadcast %cst_14 : f32 to vector<8x128xf32>
    %25 = arith.addf %23, %24 : vector<8x128xf32>
    %cst_15 = arith.constant 5.000000e-01 : f32
    %26 = vector.broadcast %cst_15 : f32 to vector<8x128xf32>
    %27 = arith.mulf %25, %26 : vector<8x128xf32>
    %c64_i32 = arith.constant 64 : i32
    %28 = tpu.dynamic_rotate %27 by %c64_i32 dim 1 : vector<8x128xf32>, i32 -> vector<8x128xf32>
    %cst_16 = arith.constant 0.00999999977 : f32
    %cst_17 = arith.constant 0.699999988 : f32
    %29 = vector.broadcast %cst_16 : f32 to vector<8x128xf32>
    %30 = arith.maximumf %29, %28 : vector<8x128xf32>
    %31 = vector.broadcast %cst_17 : f32 to vector<8x128xf32>
    %32 = arith.minimumf %31, %30 : vector<8x128xf32>
    %33 = tpu.iota {dimensions = array<i32: 1>} : vector<8x128xi32>
    %c0_18 = arith.constant 0 : index
    %c0_19 = arith.constant 0 : index
    %34 = vector.load %arg2[%c0_18, %c0_19] : memref<8x4xf32, #tpu.memory_space<vmem>>, vector<8x4xf32>
    %cst_20 = arith.constant 0.000000e+00 : f32
    %35 = vector.broadcast %cst_20 : f32 to vector<8x128xf32>
    %c0_i32 = arith.constant 0 : i32
    %36 = vector.broadcast %c0_i32 : i32 to vector<8x128xi32>
    %37 = arith.cmpi eq, %33, %36 : vector<8x128xi32>
    %c4_i32 = arith.constant 4 : i32
    %38 = vector.broadcast %c4_i32 : i32 to vector<8x128xi32>
    %39 = arith.cmpi eq, %33, %38 : vector<8x128xi32>
    %40 = arith.ori %37, %39 : vector<8x128xi1>
    %41 = vector.extract_strided_slice %34 {offsets = [0, 0], sizes = [8, 1], strides = [1, 1]} : vector<8x4xf32> to vector<8x1xf32>
    %42 = vector.shape_cast %41 : vector<8x1xf32> to vector<8x1xf32>
    %43 = vector.broadcast %42 : vector<8x1xf32> to vector<8x128xf32>
    %44 = arith.select %40, %43, %35 : vector<8x128xi1>, vector<8x128xf32>
    %c1_i32 = arith.constant 1 : i32
    %45 = vector.broadcast %c1_i32 : i32 to vector<8x128xi32>
    %46 = arith.cmpi eq, %33, %45 : vector<8x128xi32>
    %c5_i32 = arith.constant 5 : i32
    %47 = vector.broadcast %c5_i32 : i32 to vector<8x128xi32>
    %48 = arith.cmpi eq, %33, %47 : vector<8x128xi32>
    %49 = arith.ori %46, %48 : vector<8x128xi1>
    %50 = vector.extract_strided_slice %34 {offsets = [0, 1], sizes = [8, 1], strides = [1, 1]} : vector<8x4xf32> to vector<8x1xf32>
    %51 = vector.shape_cast %50 : vector<8x1xf32> to vector<8x1xf32>
    %52 = vector.broadcast %51 : vector<8x1xf32> to vector<8x128xf32>
    %53 = arith.select %49, %52, %44 : vector<8x128xi1>, vector<8x128xf32>
    %c2_i32 = arith.constant 2 : i32
    %54 = vector.broadcast %c2_i32 : i32 to vector<8x128xi32>
    %55 = arith.cmpi eq, %33, %54 : vector<8x128xi32>
    %c6_i32 = arith.constant 6 : i32
    %56 = vector.broadcast %c6_i32 : i32 to vector<8x128xi32>
    %57 = arith.cmpi eq, %33, %56 : vector<8x128xi32>
    %58 = arith.ori %55, %57 : vector<8x128xi1>
    %59 = vector.extract_strided_slice %34 {offsets = [0, 2], sizes = [8, 1], strides = [1, 1]} : vector<8x4xf32> to vector<8x1xf32>
    %60 = vector.shape_cast %59 : vector<8x1xf32> to vector<8x1xf32>
    %61 = vector.broadcast %60 : vector<8x1xf32> to vector<8x128xf32>
    %62 = arith.select %58, %61, %53 : vector<8x128xi1>, vector<8x128xf32>
    %c3_i32 = arith.constant 3 : i32
    %63 = vector.broadcast %c3_i32 : i32 to vector<8x128xi32>
    %64 = arith.cmpi eq, %33, %63 : vector<8x128xi32>
    %c7_i32 = arith.constant 7 : i32
    %65 = vector.broadcast %c7_i32 : i32 to vector<8x128xi32>
    %66 = arith.cmpi eq, %33, %65 : vector<8x128xi32>
    %67 = arith.ori %64, %66 : vector<8x128xi1>
    %68 = vector.extract_strided_slice %34 {offsets = [0, 3], sizes = [8, 1], strides = [1, 1]} : vector<8x4xf32> to vector<8x1xf32>
    %69 = vector.shape_cast %68 : vector<8x1xf32> to vector<8x1xf32>
    %70 = vector.broadcast %69 : vector<8x1xf32> to vector<8x128xf32>
    %71 = arith.select %67, %70, %62 : vector<8x128xi1>, vector<8x128xf32>
    %72 = arith.mulf %32, %71 : vector<8x128xf32>
    %73 = arith.addf %27, %72 : vector<8x128xf32>
    %cst_21 = arith.constant 5.000000e-01 : f32
    %74 = vector.broadcast %cst_21 : f32 to vector<8x128xf32>
    %75 = arith.subf %73, %74 : vector<8x128xf32>
    %76 = math.absf %75 : vector<8x128xf32>
    %cst_22 = arith.constant 5.000000e-01 : f32
    %77 = vector.broadcast %cst_22 : f32 to vector<8x128xf32>
    %78 = arith.cmpf oge, %76, %77 : vector<8x128xf32>
    %cst_23 = arith.constant 3.000000e+00 : f32
    %79 = vector.broadcast %cst_23 : f32 to vector<8x128xf32>
    %80 = arith.mulf %79, %32 : vector<8x128xf32>
    %81 = arith.addf %73, %80 : vector<8x128xf32>
    %82 = arith.subf %81, %27 : vector<8x128xf32>
    %cst_24 = arith.constant 0.166666672 : f32
    %83 = vector.broadcast %cst_24 : f32 to vector<8x128xf32>
    %84 = arith.mulf %83, %32 : vector<8x128xf32>
    %85 = arith.mulf %82, %84 : vector<8x128xf32>
    %86 = arith.select %78, %85, %73 : vector<8x128xi1>, vector<8x128xf32>
    %87 = math.log %32 : vector<8x128xf32>
    %88 = arith.subf %86, %27 : vector<8x128xf32>
    %89 = arith.divf %88, %32 : vector<8x128xf32>
    %90 = arith.mulf %89, %89 : vector<8x128xf32>
    %cst_25 = arith.constant -5.000000e-01 : f32
    %91 = vector.broadcast %cst_25 : f32 to vector<8x128xf32>
    %92 = arith.mulf %91, %90 : vector<8x128xf32>
    %93 = arith.subf %92, %87 : vector<8x128xf32>
    %cst_26 = arith.constant 0.918938517 : f32
    %94 = vector.broadcast %cst_26 : f32 to vector<8x128xf32>
    %95 = arith.subf %93, %94 : vector<8x128xf32>
    %cst_27 = arith.constant 1.41893852 : f32
    %96 = vector.broadcast %cst_27 : f32 to vector<8x128xf32>
    %97 = arith.addf %96, %87 : vector<8x128xf32>
    %c4_i32_28 = arith.constant 4 : i32
    %98 = vector.broadcast %c4_i32_28 : i32 to vector<8x128xi32>
    %99 = arith.cmpi slt, %33, %98 : vector<8x128xi32>
    %c8_i32 = arith.constant 8 : i32
    %100 = vector.broadcast %c8_i32 : i32 to vector<8x128xi32>
    %101 = arith.cmpi slt, %33, %100 : vector<8x128xi32>
    %c12_i32 = arith.constant 12 : i32
    %102 = vector.broadcast %c12_i32 : i32 to vector<8x128xi32>
    %103 = arith.cmpi slt, %33, %102 : vector<8x128xi32>
    %c16_i32 = arith.constant 16 : i32
    %104 = vector.broadcast %c16_i32 : i32 to vector<8x128xi32>
    %105 = arith.cmpi slt, %33, %104 : vector<8x128xi32>
    %c20_i32 = arith.constant 20 : i32
    %106 = vector.broadcast %c20_i32 : i32 to vector<8x128xi32>
    %107 = arith.cmpi slt, %33, %106 : vector<8x128xi32>
    %cst_29 = arith.constant 0.000000e+00 : f32
    %108 = vector.broadcast %cst_29 : f32 to vector<8x128xf32>
    %109 = arith.select %107, %97, %108 : vector<8x128xi1>, vector<8x128xf32>
    %110 = arith.select %105, %32, %109 : vector<8x128xi1>, vector<8x128xf32>
    %111 = arith.select %103, %27, %110 : vector<8x128xi1>, vector<8x128xf32>
    %112 = arith.select %101, %95, %111 : vector<8x128xi1>, vector<8x128xf32>
    %113 = arith.select %99, %86, %112 : vector<8x128xi1>, vector<8x128xf32>
    %c0_30 = arith.constant 0 : index
    %c0_31 = arith.constant 0 : index
    %114 = vector.load %arg6[%c0_30, %c0_31] : memref<8x128xf32, #tpu.memory_space<vmem>>, vector<8x128xf32>
    tpu.vector_store %arg6[%c0_30, %c0_31], %113 {strides = array<i32>} : memref<8x128xf32, #tpu.memory_space<vmem>>, vector<8x128xf32>,
    return
  }
  func.func @transform_0(%arg0: i32) -> (i32, i32) {
    %c0_i32 = arith.constant 0 : i32
    %c0_i32_0 = arith.constant 0 : i32
    return %arg0, %c0_i32 : i32, i32
  }
  func.func @transform_1(%arg0: i32) -> (i32, i32) {
    %c0_i32 = arith.constant 0 : i32
    %c0_i32_0 = arith.constant 0 : i32
    return %arg0, %c0_i32 : i32, i32
  }
  func.func @transform_2(%arg0: i32) -> (i32, i32) {
    %c0_i32 = arith.constant 0 : i32
    %c0_i32_0 = arith.constant 0 : i32
    %c0_i32_1 = arith.constant 0 : i32
    return %c0_i32, %c0_i32_0 : i32, i32
  }
  func.func @transform_3(%arg0: i32) -> (i32, i32) {
    %c0_i32 = arith.constant 0 : i32
    %c0_i32_0 = arith.constant 0 : i32
    %c0_i32_1 = arith.constant 0 : i32
    return %c0_i32, %c0_i32_0 : i32, i32
  }
  func.func @transform_4(%arg0: i32) -> (i32, i32) {
    %c0_i32 = arith.constant 0 : i32
    %c0_i32_0 = arith.constant 0 : i32
    %c0_i32_1 = arith.constant 0 : i32
    return %c0_i32, %c0_i32_0 : i32, i32
  }
  func.func @transform_5(%arg0: i32) -> (i32, i32) {
    %c0_i32 = arith.constant 0 : i32
    %c0_i32_0 = arith.constant 0 : i32
    return %arg0, %c0_i32 : i32, i32
  }
}

</mosaic_0001>

<llo_original>
// kernel: tpu_custom_call.1
$region0: #{tpu_custom_call.1}
  #allocation0 [shape = 'u32[]', space=smem, size = 0x4, offset = 0x4, fixed_abs, tag = 'smem constant byte address 0x4 - core index']
  #allocation1 [shape = 'u32[72,128]{1,0:T(1,128)}', space=vmem, size = 0x9000, scoped, tag = 'internal scratch']
  %s0 = inlined_call_operand.vmem [shape: f32[8,16], index: 0, kind: input, shape index: {}]
  %s1 = inlined_call_operand.vmem [shape: f32[8,4], index: 1, kind: input, shape index: {}]
  %s2 = inlined_call_operand.hbm [shape: bf16[16,128], index: 2, kind: input, shape index: {}]
  %s3 = inlined_call_operand.hbm [shape: bf16[256,128], index: 3, kind: input, shape index: {}]
  %s4 = inlined_call_operand.hbm [shape: f32[8,128], index: 4, kind: input, shape index: {}]
  %s5 = inlined_call_operand.hbm [shape: f32[8,128], index: 5, kind: output, shape index: {}]
  %s6 = sld [smem:[#allocation0]]
  $region42: #{tpu_custom_call.1} parent=0
    _
  %s8 = ssub.s32 1, %s6
  %s9 = scalar_select 0, %s8, %s6
  $region1: #{tpu_custom_call.1} parent=0
    #allocation2 [shape = 'u8[4096]{0}', space=vmem, size = 0x1000, scoped, tag = 'input window, operand 2, single buffered']
    #allocation3 [shape = 's32[1]{0}', space=sflag, size = 0x4, scoped, tag = 'scoped memory for tpu_custom_call.1']
    #allocation4 [shape = 's32[1]{0}', space=sflag, size = 0x4, scoped, tag = 'scoped memory for tpu_custom_call.1']
    #allocation5 [shape = 'u8[65536]{0}', space=vmem, size = 0x10000, scoped, tag = 'input window, operand 3, single buffered']
    #allocation6 [shape = 's32[1]{0}', space=sflag, size = 0x4, scoped, tag = 'scoped memory for tpu_custom_call.1']
    #allocation7 [shape = 'u8[4096]{0}', space=vmem, size = 0x1000, scoped, tag = 'input window, operand 4, single buffered']
    #allocation8 [shape = 'u8[4096]{0}', space=vmem, size = 0x1000, scoped, tag = 'output window, operand 0, single buffered']
    %10 = vsyncpa [#allocation3], 0
    %11 = vsyncpa [#allocation6], 0
    %12 = vsyncpa [#allocation4], 0
    // Predicated region
    $region2: #{tpu_custom_call.1} parent=1 // pred_check
      _
    $region3: #{tpu_custom_call.1} parent=1 // pred_check_branch
      %14 = sbr.rel (0) target = $region5
    $region4: #{tpu_custom_call.1} parent=1 // pred_region
      _
    $region5: #{tpu_custom_call.1} parent=1 // pred_fallthru
      _
    // Predicated region
    $region6: #{tpu_custom_call.1} parent=1 // pred_check
      _
    $region7: #{tpu_custom_call.1} parent=1 // pred_check_branch
      %16 = sbr.rel (0) target = $region9
    $region8: #{tpu_custom_call.1} parent=1 // pred_region
      _
    $region9: #{tpu_custom_call.1} parent=1 // pred_fallthru
      _
    // Predicated region
    $region10: #{tpu_custom_call.1} parent=1 // pred_check
      _
    $region11: #{tpu_custom_call.1} parent=1 // pred_check_branch
      %18 = sbr.rel (0) target = $region13
    $region12: #{tpu_custom_call.1} parent=1 // pred_region
      %20 = vsyncadd [#allocation3], 0
      %s21 = sshll.u32 %s2, 4
      %s22 = int_to_ptr.hbm [resolvable:$true] %s21
      %s23 = sshll.u32 [#allocation2], 4
      %s24 = int_to_ptr.vmem [resolvable:$true] %s23
      %29 = dma.hbm_to_vmem [thread:$0]  %s22, 128, %s24, [#allocation3], 64, 64, 4
    $region13: #{tpu_custom_call.1} parent=1 // pred_fallthru
      _
    // Predicated region
    $region14: #{tpu_custom_call.1} parent=1 // pred_check
      _
    $region15: #{tpu_custom_call.1} parent=1 // pred_check_branch
      %31 = sbr.rel (0) target = $region17
    $region16: #{tpu_custom_call.1} parent=1 // pred_region
      %33 = vsyncadd [#allocation6], 0
      %s34 = sshll.u32 %s3, 4
      %s35 = int_to_ptr.hbm [resolvable:$true] %s34
      %s36 = sshll.u32 [#allocation5], 4
      %s37 = int_to_ptr.vmem [resolvable:$true] %s36
      %42 = dma.hbm_to_vmem [thread:$0]  %s35, 2048, %s37, [#allocation6], 64, 64, 4
    $region17: #{tpu_custom_call.1} parent=1 // pred_fallthru
      _
    // Predicated region
    $region18: #{tpu_custom_call.1} parent=1 // pred_check
      _
    $region19: #{tpu_custom_call.1} parent=1 // pred_check_branch
      %44 = sbr.rel (0) target = $region21
    $region20: #{tpu_custom_call.1} parent=1 // pred_region
      %46 = vsyncadd [#allocation6], 0
      %s48 = sshll.u32 %s4, 4
      %s49 = int_to_ptr.hbm [resolvable:$true] %s48
      %s50 = sshll.u32 [#allocation7], 4
      %s51 = int_to_ptr.vmem [resolvable:$true] %s50
      %53 = dma.hbm_to_vmem [thread:$0]  %s49, 128, %s51, [#allocation6]
    $region21: #{tpu_custom_call.1} parent=1 // pred_fallthru
      _
    // Predicated region
    $region22: #{tpu_custom_call.1} parent=1 // pred_check
      _
    $region23: #{tpu_custom_call.1} parent=1 // pred_check_branch
      %55 = sbr.rel (0) target = $region25
    $region24: #{tpu_custom_call.1} parent=1 // pred_region
      %57 = dma.done [#allocation3], 128
    $region25: #{tpu_custom_call.1} parent=1 // pred_fallthru
      _
    // Predicated region
    $region26: #{tpu_custom_call.1} parent=1 // pred_check
      _
    $region27: #{tpu_custom_call.1} parent=1 // pred_check_branch
      %59 = sbr.rel (0) target = $region29
    $region28: #{tpu_custom_call.1} parent=1 // pred_region
      %61 = dma.done [#allocation6], 2048
    $region29: #{tpu_custom_call.1} parent=1 // pred_fallthru
      _
    // Predicated region
    $region30: #{tpu_custom_call.1} parent=1 // pred_check
      _
    $region31: #{tpu_custom_call.1} parent=1 // pred_check_branch
      %63 = sbr.rel (0) target = $region33
    $region32: #{tpu_custom_call.1} parent=1 // pred_region
      %65 = dma.done [#allocation6], 128
    $region33: #{tpu_custom_call.1} parent=1 // pred_fallthru
      _
    %v67 = vld [vmem:[%s0] sm:$0xff]
    %v68 = vpack.c.bf16 %v67, %v67
    %v69 = vld [vmem:[#allocation2] sm:$0xf]
    %v70 = vld [vmem:[#allocation2 + $0x4] sm:$0xf]
    %v71 = vld [vmem:[#allocation5] sm:$0xf]
    %v72 = vld [vmem:[#allocation5 + $0x4] sm:$0xf]
    %v73 = vld [vmem:[#allocation5 + $0x8] sm:$0xf]
    %v74 = vld [vmem:[#allocation5 + $0xc] sm:$0xf]
    %v75 = vld [vmem:[#allocation5 + $0x10] sm:$0xf]
    %v76 = vld [vmem:[#allocation5 + $0x14] sm:$0xf]
    %v77 = vld [vmem:[#allocation5 + $0x18] sm:$0xf]
    %v78 = vld [vmem:[#allocation5 + $0x1c] sm:$0xf]
    %v79 = vld [vmem:[#allocation5 + $0x20] sm:$0xf]
    %v80 = vld [vmem:[#allocation5 + $0x24] sm:$0xf]
    %v81 = vld [vmem:[#allocation5 + $0x28] sm:$0xf]
    %v82 = vld [vmem:[#allocation5 + $0x2c] sm:$0xf]
    %v83 = vld [vmem:[#allocation5 + $0x30] sm:$0xf]
    %v84 = vld [vmem:[#allocation5 + $0x34] sm:$0xf]
    %v85 = vld [vmem:[#allocation5 + $0x38] sm:$0xf]
    %v86 = vld [vmem:[#allocation5 + $0x3c] sm:$0xf]
    %v87 = vld [vmem:[#allocation5 + $0x40] sm:$0xf]
    %v88 = vld [vmem:[#allocation5 + $0x44] sm:$0xf]
    %v89 = vld [vmem:[#allocation5 + $0x48] sm:$0xf]
    %v90 = vld [vmem:[#allocation5 + $0x4c] sm:$0xf]
    %v91 = vld [vmem:[#allocation5 + $0x50] sm:$0xf]
    %v92 = vld [vmem:[#allocation5 + $0x54] sm:$0xf]
    %v93 = vld [vmem:[#allocation5 + $0x58] sm:$0xf]
    %v94 = vld [vmem:[#allocation5 + $0x5c] sm:$0xf]
    %v95 = vld [vmem:[#allocation5 + $0x60] sm:$0xf]
    %v96 = vld [vmem:[#allocation5 + $0x64] sm:$0xf]
    %v97 = vld [vmem:[#allocation5 + $0x68] sm:$0xf]
    %v98 = vld [vmem:[#allocation5 + $0x6c] sm:$0xf]
    %v99 = vld [vmem:[#allocation5 + $0x70] sm:$0xf]
    %v100 = vld [vmem:[#allocation5 + $0x74] sm:$0xf]
    %v101 = vld [vmem:[#allocation5 + $0x78] sm:$0xf]
    %v102 = vld [vmem:[#allocation5 + $0x7c] sm:$0xf]
    %v103 = vld [vmem:[#allocation7] sm:$0x1]
    %v104 = vld [vmem:[#allocation7 + $0x1] sm:$0x1]
    %v105 = vld [vmem:[#allocation7 + $0x2] sm:$0x1]
    %v106 = vperm.slane %v103, 0
    %v109 = vunpack.c.l.b16 %v69
    %v110 = vunpack.c.l.b16 %v70
    %v111 = vpack.c.b16 %v110, %v109
    %vm113 = vcmask 130048
    %v115 = vsel %vm113, %v68, 0
    %117 = vmatpush.bf16.msra.mxu0 0
    %118 = vmatpush.bf16.msra.mxu0 0
    %119 = vmatpush.bf16.msra.mxu0 0
    %120 = vmatpush.bf16.msra.mxu0 0
    %121 = vmatpush.bf16.msra.mxu0 0
    %122 = vmatpush.bf16.msra.mxu0 0
    %123 = vmatpush.bf16.msra.mxu0 0
    %124 = vmatpush.bf16.msra.mxu0 %v111
    %125 = vmatmul.bf16.gmra.mxu0 %v115
    %v126 = vpop.f32.mrf.mxu0
    %v127 = vadd.f32 %v106, %v126
    %v128 = vpop.f32.mrf.mxu0
    %129 = vdwg.mxu0
    %v130 = vmax.f32 %v127, 0.0
    %v131 = vpack.c.bf16 %v130, %v130
    %v132 = vperm.slane %v104, 0
    %v149 = vunpack.c.l.b16 %v71
    %v150 = vunpack.c.l.b16 %v72
    %v151 = vunpack.c.l.b16 %v73
    %v152 = vunpack.c.l.b16 %v74
    %v153 = vunpack.c.l.b16 %v75
    %v154 = vunpack.c.l.b16 %v76
    %v155 = vunpack.c.l.b16 %v77
    %v156 = vunpack.c.l.b16 %v78
    %v157 = vunpack.c.l.b16 %v79
    %v158 = vunpack.c.l.b16 %v80
    %v159 = vunpack.c.l.b16 %v81
    %v160 = vunpack.c.l.b16 %v82
    %v161 = vunpack.c.l.b16 %v83
    %v162 = vunpack.c.l.b16 %v84
    %v163 = vunpack.c.l.b16 %v85
    %v164 = vunpack.c.l.b16 %v86
    %v165 = vpack.c.b16 %v150, %v149
    %v166 = vpack.c.b16 %v152, %v151
    %v167 = vpack.c.b16 %v154, %v153
    %v168 = vpack.c.b16 %v156, %v155
    %v169 = vpack.c.b16 %v158, %v157
    %v170 = vpack.c.b16 %v160, %v159
    %v171 = vpack.c.b16 %v162, %v161
    %v172 = vpack.c.b16 %v164, %v163
    %181 = vmatpush.bf16.msra.mxu0 %v172
    %182 = vmatpush.bf16.msra.mxu0 %v171
    %183 = vmatpush.bf16.msra.mxu0 %v170
    %184 = vmatpush.bf16.msra.mxu0 %v169
    %185 = vmatpush.bf16.msra.mxu0 %v168
    %186 = vmatpush.bf16.msra.mxu0 %v167
    %187 = vmatpush.bf16.msra.mxu0 %v166
    %188 = vmatpush.bf16.msra.mxu0 %v165
    %189 = vmatmul.bf16.gmra.mxu0 %v131
    %v190 = vpop.f32.mrf.mxu0
    %v191 = vadd.f32 %v132, %v190
    %v192 = vpop.f32.mrf.mxu0
    %193 = vdwg.mxu0
    %v194 = vmax.f32 %v191, 0.0
    %v195 = vpack.c.bf16 %v194, %v194
    %v196 = vperm.slane %v105, 0
    %v213 = vunpack.c.l.b16 %v87
    %v214 = vunpack.c.l.b16 %v88
    %v215 = vunpack.c.l.b16 %v89
    %v216 = vunpack.c.l.b16 %v90
    %v217 = vunpack.c.l.b16 %v91
    %v218 = vunpack.c.l.b16 %v92
    %v219 = vunpack.c.l.b16 %v93
    %v220 = vunpack.c.l.b16 %v94
    %v221 = vunpack.c.l.b16 %v95
    %v222 = vunpack.c.l.b16 %v96
    %v223 = vunpack.c.l.b16 %v97
    %v224 = vunpack.c.l.b16 %v98
    %v225 = vunpack.c.l.b16 %v99
    %v226 = vunpack.c.l.b16 %v100
    %v227 = vunpack.c.l.b16 %v101
    %v228 = vunpack.c.l.b16 %v102
    %v229 = vpack.c.b16 %v214, %v213
    %v230 = vpack.c.b16 %v216, %v215
    %v231 = vpack.c.b16 %v218, %v217
    %v232 = vpack.c.b16 %v220, %v219
    %v233 = vpack.c.b16 %v222, %v221
    %v234 = vpack.c.b16 %v224, %v223
    %v235 = vpack.c.b16 %v226, %v225
    %v236 = vpack.c.b16 %v228, %v227
    %245 = vmatpush.bf16.msra.mxu0 %v236
    %246 = vmatpush.bf16.msra.mxu0 %v235
    %247 = vmatpush.bf16.msra.mxu0 %v234
    %248 = vmatpush.bf16.msra.mxu0 %v233
    %249 = vmatpush.bf16.msra.mxu0 %v232
    %250 = vmatpush.bf16.msra.mxu0 %v231
    %251 = vmatpush.bf16.msra.mxu0 %v230
    %252 = vmatpush.bf16.msra.mxu0 %v229
    %253 = vmatmul.bf16.gmra.mxu0 %v195
    %v254 = vpop.f32.mrf.mxu0
    %v255 = vadd.f32 %v196, %v254
    %v256 = vpop.f32.mrf.mxu0
    %257 = vdwg.mxu0
    %v258 = vtanh.pop %v255
    %v259 = vadd.f32 %v258, 1.0
    %v260 = vmul.f32 %v259, 0.5
    %261 = vrot.lane.b32.xlu0 %v260, 64
    %v262 = vpop.permute.xlu0 %261
    %v263 = vmax.f32 %v262, 0.01
    %v264 = vmin.f32 %v263, 0.7
    %v265 = vlaneseq
    %v266 = vand.u32 %v265, 127
    %v267 = vld [vmem:[%s1] sm:$0xff]
    %vm268 = vcmp.eq.s32.totalorder %v266, 0
    %vm269 = vcmp.eq.s32.totalorder %v266, 4
    %vm270 = vmor %vm268, %vm269
    %272 = vset.pattern.permute.xlu0 0
    %273 = vperm.xlu0 %272, %v267
    %v274 = vpop.permute.xlu0 %273
    %v276 = vsel %vm270, %v274, 0.0
    %vm277 = vcmp.eq.s32.totalorder %v266, 1
    %vm278 = vcmp.eq.s32.totalorder %v266, 5
    %vm279 = vmor %vm277, %vm278
    %280 = vset.pattern.permute.xlu0 1
    %281 = vperm.xlu0 %280, %v267
    %v282 = vpop.permute.xlu0 %281
    %v284 = vsel %vm279, %v282, %v276
    %vm285 = vcmp.eq.s32.totalorder %v266, 2
    %vm286 = vcmp.eq.s32.totalorder %v266, 6
    %vm287 = vmor %vm285, %vm286
    %288 = vset.pattern.permute.xlu0 2
    %289 = vperm.xlu0 %288, %v267
    %v290 = vpop.permute.xlu0 %289
    %v292 = vsel %vm287, %v290, %v284
    %vm293 = vcmp.eq.s32.totalorder %v266, 3
    %vm294 = vcmp.eq.s32.totalorder %v266, 7
    %vm295 = vmor %vm293, %vm294
    %296 = vset.pattern.permute.xlu0 3
    %297 = vperm.xlu0 %296, %v267
    %v298 = vpop.permute.xlu0 %297
    %v300 = vsel %vm295, %v298, %v292
    %v301 = vmul.f32 %v264, %v300
    %v302 = vadd.f32 %v260, %v301
    %v303 = vsub.f32 %v302, 0.5
    %v304 = vand.u32 2147483647, %v303
    %vm305 = vcmp.ge.f32.partialorder %v304, 0.5
    %v306 = vmul.f32 %v264, 3.0
    %v307 = vadd.f32 %v302, %v306
    %v308 = vsub.f32 %v307, %v260
    %v309 = vmul.f32 %v264, 0.16666667
    %v310 = vmul.f32 %v308, %v309
    %v311 = vsel %vm305, %v310, %v302
    %v312 = vlog2.pop %v264
    %v313 = vmul.f32 %v312, 0.6931472
    %v314 = vsub.f32 %v311, %v260
    %v315 = vrcp.pop %v264
    %v316 = vmul.f32 %v264, %v315
    %v317 = vsub.f32 1.0, %v316
    %v318 = vmul.f32 %v315, %v317
    %v319 = vadd.f32 %v315, %v318
    %vm320 = vweird.f32 %v264
    %vm321 = vweird.f32 %v315
    %vm322 = vmor %vm320, %vm321
    %v323 = vsel %vm322, %v315, %v319
    %v324 = vand.u32 2147483647, %v264
    %vm325 = vcmp.eq.f32.partialorder %v324, 8.507059e+37
    %v326 = vand.u32 %v264, 2147483648
    %v327 = vor.u32 1.1754944e-38, %v326
    %v328 = vsel %vm325, %v327, %v323
    %v329 = vmul.f32 %v314, %v328
    %v330 = vmul.f32 %v329, %v329
    %v331 = vmul.f32 %v330, -0.5
    %v332 = vsub.f32 %v331, %v313
    %v333 = vsub.f32 %v332, 0.9189385
    %v334 = vadd.f32 %v313, 1.4189385
    %vm335 = vcmp.lt.s32.totalorder %v266, 4
    %vm336 = vcmp.lt.s32.totalorder %v266, 8
    %vm337 = vcmp.lt.s32.totalorder %v266, 12
    %vm338 = vcmp.lt.s32.totalorder %v266, 16
    %vm339 = vcmp.lt.s32.totalorder %v266, 20
    %v340 = vsel %vm339, %v334, 0.0
    %v341 = vsel %vm338, %v264, %v340
    %v342 = vsel %vm337, %v260, %v341
    %v343 = vsel %vm336, %v333, %v342
    %v344 = vsel %vm335, %v311, %v343
    %345 = vst [vmem:[#allocation8] sm:$0xff] %v344
    // Predicated region
    $region34: #{tpu_custom_call.1} parent=1 // pred_check
      _
    $region35: #{tpu_custom_call.1} parent=1 // pred_check_branch
      %347 = sbr.rel (0) target = $region37
    $region36: #{tpu_custom_call.1} parent=1 // pred_region
      %349 = vsyncadd [#allocation4], 0
      %s351 = sshll.u32 [#allocation8], 4
      %s352 = int_to_ptr.vmem [resolvable:$true] %s351
      %s353 = sshll.u32 %s5, 4
      %s354 = int_to_ptr.hbm [resolvable:$true] %s353
      %356 = dma.vmem_to_hbm [thread:$0]  %s352, 128, %s354, [#allocation4]
    $region37: #{tpu_custom_call.1} parent=1 // pred_fallthru
      _
    // Predicated region
    $region38: #{tpu_custom_call.1} parent=1 // pred_check
      _
    $region39: #{tpu_custom_call.1} parent=1 // pred_check_branch
      %358 = sbr.rel (0) target = $region41
    $region40: #{tpu_custom_call.1} parent=1 // pred_region
      %360 = dma.done [#allocation4], 128
    $region41: #{tpu_custom_call.1} parent=1 // pred_fallthru
      _
    %361 = vsyncpa [#allocation3], 1
    %362 = vsyncpa [#allocation6], 1
    %363 = vsyncpa [#allocation4], 1

</llo_original>
